<compile_context>
chip_gen: v6e
topology: v6e:2x2x1
jax: 0.10.0
libtpu: 0.0.40
codegen_flags: <defaults>
</compile_context>

<pallas_src>
import functools
import math

import jax
import jax.numpy as jnp
from jax.experimental import pallas as pl
from jax.experimental.pallas import tpu as pltpu


def _round_up(x: int, m: int) -> int:
    return ((x + m - 1) // m) * m


def _pad_dim(d: int) -> int:
    # Lane-dense padding.  Small dims -> 128 (native MXU width, no waste);
    # production-size dims -> 256 so the 2x256x256 MXU on v6e/v7x is fully fed.
    return _round_up(d, 256) if d > 256 else _round_up(d, 128)


def _elasticnet_kernel(*refs, activation: str, n_layers: int):
    """Fused MLP:  h = act(h @ W_i + b_i)  for all layers, single output write.

    refs = (x_ref, w0_ref, b0_ref, w1_ref, b1_ref, ..., o_ref)
      x_ref : (Bt, D0)        VMEM   (batch tile, unpadded input features)
      wi_ref: (Di, D(i+1)p)   VMEM   (zero-padded, already transposed; bf16 or f32)
      bi_ref: (1,  D(i+1)p)   VMEM   (zero-padded, f32)
      o_ref : (Bt, DLp)       VMEM
    Padded lanes are harmless: padded weight ROWS are zero, so even sigmoid's
    0.5-valued padded activations contribute 0 to the next layer.
    """
    x_ref = refs[0]
    o_ref = refs[-1]
    params = refs[1:-1]

    h = x_ref[...].astype(jnp.float32)
    for i in range(n_layers):
        w = params[2 * i][...]
        b = params[2 * i + 1][...]
        # MXU matmul in the weights' dtype (bf16 fast path on v6e/v7x),
        # f32 accumulation; bias-add / activation stay in f32 (v5e-safe).
        h = jnp.dot(h.astype(w.dtype), w, preferred_element_type=jnp.float32) + b
        if activation == "sigmoid":
            h = jax.nn.sigmoid(h)        # EUP
        else:                            # 'relu' (default, same as torch module)
            h = jnp.maximum(h, 0.0)      # VPU
    o_ref[...] = h.astype(o_ref.dtype)
    # TODO(synk): on v5e/v6e with tiny batch tiles, interleave two independent
    # sub-tiles per layer to hide MXU result-FIFO push->pop latency.


def _elasticnet_forward(x, weights_t, biases, *, activation: str,
                        out_features: int, single_buffer_weights: bool,
                        vmem_cap: int):
    """Single fused pallas_call over the whole layer stack (jit-friendly)."""
    B, d_in = x.shape
    n_layers = len(weights_t)
    out_pad = weights_t[-1].shape[1]
    assert weights_t[0].shape[0] == d_in

    # ---- VMEM budgeting (all static / trace-time arithmetic) ---------------
    wbuf = 1 if single_buffer_weights else 2
    param_bytes = sum(int(w.size) * w.dtype.itemsize + int(b.size) * b.dtype.itemsize
                      for w, b in zip(weights_t, biases))
    weight_footprint = wbuf * param_bytes
    max_width = max(w.shape[1] for w in weights_t)

    def act_bytes(bt):
        # double-buffered input & output tiles + widest f32 intermediate (x2 slack)
        return (2 * bt * d_in * x.dtype.itemsize
                + 2 * bt * out_pad * 4
                + 2 * bt * max_width * 4)

    budget = int(0.8 * vmem_cap)
    if B <= 512:
        b_tile = B                          # single full-extent batch block
    else:
        b_tile = 256
        for cand in (1024, 512, 256):       # sweep downward to what fits
            if weight_footprint + act_bytes(cand) + (4 << 20) <= budget:
                b_tile = cand
                break
    # TODO(synk): if weight_footprint alone blows the budget (huge nets,
    # especially on v7x's 64 MiB/TC), fall back to a per-layer / K-tiled
    # pipeline instead of keeping the whole stack VMEM-resident.

    footprint = weight_footprint + act_bytes(b_tile)
    vmem_limit = int(min(0.9 * vmem_cap,
                         max(32 << 20, footprint * 3 // 2 + (4 << 20))))

    # ---- specs --------------------------------------------------------------
    grid = (pl.cdiv(B, b_tile),)            # ragged last tile handled by Pallas
    in_specs = [pl.BlockSpec((b_tile, d_in), lambda i: (i, 0))]
    operands = [x]
    if single_buffer_weights:
        # Constant index_map -> resident across the grid; single-buffer so the
        # default double-buffering doesn't waste VMEM on never-changing data.
        resident_kw = dict(pipeline_mode=pl.Buffered(1))
    else:
        resident_kw = {}
    for w, b in zip(weights_t, biases):
        di, do = w.shape
        in_specs.append(pl.BlockSpec((di, do), lambda i: (0, 0), **resident_kw))
        in_specs.append(pl.BlockSpec((1, do), lambda i: (0, 0), **resident_kw))
        operands.append(w)
        operands.append(b)

    # ---- cost hint for the XLA scheduler ------------------------------------
    flops = 2 * B * sum(w.shape[0] * w.shape[1] for w in weights_t)
    transcendentals = (B * sum(w.shape[1] for w in weights_t)
                       if activation == "sigmoid" else 0)
    bytes_accessed = (int(x.size) * x.dtype.itemsize + param_bytes
                      + B * out_pad * 4)

    kernel = functools.partial(_elasticnet_kernel, activation=activation,
                               n_layers=n_layers)

    out = pl.pallas_call(
        kernel,
        out_shape=jax.ShapeDtypeStruct((B, out_pad), jnp.float32),
        grid=grid,
        in_specs=in_specs,
        out_specs=pl.BlockSpec((b_tile, out_pad), lambda i: (i, 0)),
        compiler_params=pltpu.CompilerParams(
            dimension_semantics=("parallel",),
            vmem_limit_bytes=vmem_limit),
        cost_estimate=pl.CostEstimate(flops=flops,
                                      transcendentals=transcendentals,
                                      bytes_accessed=bytes_accessed),
    )(*operands)

    # Strip output-lane padding once, outside the kernel.
    return out[:, :out_features] if out_features != out_pad else out


class ElasticNetPallas:
    """JAX/Pallas replica of the ElasticNet forward pass (fused, jitted).

    Only the forward pass is implemented as a kernel.
    # TODO(synk): addNeurons/removeNeurons/addLayer/removeLayer and the
    # PCA-based redundancy scoring are host-side structural mutations of the
    # parameter list with no Pallas equivalent; they are out of scope here.
    """

    def __init__(self, layers_composition, inputs, outputs, activation="relu",
                 *, param_dtype=jnp.float32, key=jax.random.PRNGKey(0)):
        self.layers_composition = [inputs] + list(layers_composition) + [outputs]
        if activation not in ("relu", "sigmoid"):
            activation = "relu"
        self.activation = activation
        self.inputs = inputs
        self.outputs = outputs
        self.param_dtype = jnp.dtype(param_dtype)

        try:
            self._vmem_cap = int(pltpu.get_tpu_info().vmem_capacity_bytes)
        except Exception:
            self._vmem_cap = 64 << 20    # conservative (v7x per-TensorCore)

        # Unpadded f32 parameters (torch.nn.Linear default init:
        # U(-1/sqrt(fan_in), 1/sqrt(fan_in)) for both weight and bias) — used
        # by the pure-JAX reference.
        self._weights = []
        self._biases = []

        # Kernel-ready parameters: transposed (in, out), zero-padded feature
        # dims (first layer's input dim kept unpadded so x needs no pre-pad),
        # weights optionally stored in bf16 for the MXU fast path.
        self.weights_t = []
        self.biases = []

        for i in range(len(self.layers_composition) - 1):
            fan_in = self.layers_composition[i]
            fan_out = self.layers_composition[i + 1]
            key, kw, kb = jax.random.split(key, 3)
            bound = 1.0 / math.sqrt(fan_in)
            w = jax.random.uniform(kw, (fan_out, fan_in), jnp.float32,
                                   minval=-bound, maxval=bound)
            b = jax.random.uniform(kb, (fan_out,), jnp.float32,
                                   minval=-bound, maxval=bound)
            self._weights.append(w)
            self._biases.append(b)

            in_dim = fan_in if i == 0 else _pad_dim(fan_in)
            out_pad = _pad_dim(fan_out)
            w_t = (jnp.zeros((in_dim, out_pad), jnp.float32)
                   .at[:fan_in, :fan_out].set(jnp.transpose(w))
                   ).astype(self.param_dtype)
            b_p = jnp.zeros((1, out_pad), jnp.float32).at[0, :fan_out].set(b)
            self.weights_t.append(w_t)
            self.biases.append(b_p)

        self._fwd = None   # chosen lazily (probe Buffered(1), fall back if needed)

    def _make_forward(self, single_buffer_weights):
        return jax.jit(functools.partial(
            _elasticnet_forward,
            activation=self.activation,
            out_features=self.outputs,
            single_buffer_weights=single_buffer_weights,
            vmem_cap=self._vmem_cap,
        ))

    def __call__(self, x):
        if self._fwd is None:
            last_err = None
            for single_buf in (True, False):
                fwd = self._make_forward(single_buf)
                try:
                    jax.block_until_ready(
                        fwd(x, tuple(self.weights_t), tuple(self.biases)))
                    self._fwd = fwd
                    break
                except Exception as e:   # pl.Buffered(1) unsupported, etc.
                    last_err = e
            if self._fwd is None:
                raise last_err
        return self._fwd(x, tuple(self.weights_t), tuple(self.biases))

    def reference(self, x):
        """Pure-JAX reference matching the torch forward pass (f32 params)."""
        for w, b in zip(self._weights, self._biases):
            x = x @ w.T + b
            if self.activation == "sigmoid":
                x = jax.nn.sigmoid(x)
            else:
                x = jnp.maximum(x, 0.0)
        return x


if __name__ == "__main__":
    key = jax.random.PRNGKey(0)
    k_x, k_p = jax.random.split(key)

    batch = 8
    inputs = 32
    hidden = [64, 48]
    outputs = 16

    x = jax.random.normal(k_x, (batch, inputs), jnp.float32)

    # --- f32 parameter path (exact torch semantics) -------------------------
    model = ElasticNetPallas(hidden, inputs, outputs, activation="relu", key=k_p)
    out = jax.block_until_ready(model(x))
    ref = jax.block_until_ready(model.reference(x))
    assert out.shape == (batch, outputs)
    assert bool(jnp.all(jnp.isfinite(out)))
    assert bool(jnp.all(out >= 0.0))       # relu applied after every layer
    assert bool(jnp.allclose(out, ref, atol=1e-5, rtol=1e-5))

    # --- bf16-weight MXU fast path (f32 accumulate / activation) ------------
    model_bf16 = ElasticNetPallas(hidden, inputs, outputs, activation="relu",
                                  param_dtype=jnp.bfloat16, key=k_p)
    out_bf16 = jax.block_until_ready(model_bf16(x))
    assert out_bf16.shape == (batch, outputs)
    assert bool(jnp.all(jnp.isfinite(out_bf16)))
    assert bool(jnp.allclose(out_bf16, ref, atol=3e-2, rtol=3e-2))

    # --- sigmoid activation path ---------------------------------------------
    model_sig = ElasticNetPallas(hidden, inputs, outputs, activation="sigmoid",
                                 key=k_p)
    out_sig = jax.block_until_ready(model_sig(x))
    ref_sig = jax.block_until_ready(model_sig.reference(x))
    assert bool(jnp.allclose(out_sig, ref_sig, atol=1e-5, rtol=1e-5))

    print("KERNEL_OK")
</pallas_src>

<mosaic_0001>
module attributes {stable_mosaic.version = 11 : i64} {
  func.func @_elasticnet_kernel(%arg0: i32, %arg1: memref<8x32xf32, #tpu.memory_space<vmem>>, %arg2: memref<32x128xf32, #tpu.memory_space<vmem>>, %arg3: memref<1x128xf32, #tpu.memory_space<vmem>>, %arg4: memref<128x128xf32, #tpu.memory_space<vmem>>, %arg5: memref<1x128xf32, #tpu.memory_space<vmem>>, %arg6: memref<128x128xf32, #tpu.memory_space<vmem>>, %arg7: memref<1x128xf32, #tpu.memory_space<vmem>>, %arg8: memref<8x128xf32, #tpu.memory_space<vmem>>) attributes {dimension_semantics = [#tpu.dimension_semantics<parallel>], iteration_bounds = array<i64: 1>, scalar_prefetch = 0 : i64, scratch_operands = 0 : i64, tpu.core_type = #tpu.core_type<tc>, window_params = [{transform_indices = @transform_0, window_bounds = array<i64: 8, 32>}, {pipeline_mode = #tpu.pipeline_mode<synchronous>, transform_indices = @transform_1, window_bounds = array<i64: 32, 128>}, {pipeline_mode = #tpu.pipeline_mode<synchronous>, transform_indices = @transform_2, window_bounds = array<i64: 1, 128>}, {pipeline_mode = #tpu.pipeline_mode<synchronous>, transform_indices = @transform_3, window_bounds = array<i64: 128, 128>}, {pipeline_mode = #tpu.pipeline_mode<synchronous>, transform_indices = @transform_4, window_bounds = array<i64: 1, 128>}, {pipeline_mode = #tpu.pipeline_mode<synchronous>, transform_indices = @transform_5, window_bounds = array<i64: 128, 128>}, {pipeline_mode = #tpu.pipeline_mode<synchronous>, transform_indices = @transform_6, window_bounds = array<i64: 1, 128>}, {transform_indices = @transform_7, window_bounds = array<i64: 8, 128>}]} {
    %c0 = arith.constant 0 : index
    %c0_0 = arith.constant 0 : index
    %0 = vector.load %arg1[%c0, %c0_0] : memref<8x32xf32, #tpu.memory_space<vmem>>, vector<8x32xf32>
    %c0_1 = arith.constant 0 : index
    %c0_2 = arith.constant 0 : index
    %1 = vector.load %arg2[%c0_1, %c0_2] : memref<32x128xf32, #tpu.memory_space<vmem>>, vector<32x128xf32>
    %c0_3 = arith.constant 0 : index
    %c0_4 = arith.constant 0 : index
    %2 = vector.load %arg3[%c0_3, %c0_4] : memref<1x128xf32, #tpu.memory_space<vmem>>, vector<1x128xf32>
    %cst = arith.constant dense<0.000000e+00> : vector<8x128xf32>
    %3 = tpu.matmul %0, %1, %cst {dimension_numbers = #tpu.dot_dimension_numbers<[1], [0], [0], [1], [0, 0, 1, 1], [], []>} : vector<8x32xf32>, vector<32x128xf32>, vector<8x128xf32> -> vector<8x128xf32>
    %4 = vector.broadcast %2 : vector<1x128xf32> to vector<8x128xf32>
    %5 = arith.addf %3, %4 : vector<8x128xf32>
    %cst_5 = arith.constant 0.000000e+00 : f32
    %6 = vector.broadcast %cst_5 : f32 to vector<8x128xf32>
    %7 = arith.maximumf %5, %6 : vector<8x128xf32>
    %c0_6 = arith.constant 0 : index
    %c0_7 = arith.constant 0 : index
    %8 = vector.load %arg4[%c0_6, %c0_7] : memref<128x128xf32, #tpu.memory_space<vmem>>, vector<128x128xf32>
    %c0_8 = arith.constant 0 : index
    %c0_9 = arith.constant 0 : index
    %9 = vector.load %arg5[%c0_8, %c0_9] : memref<1x128xf32, #tpu.memory_space<vmem>>, vector<1x128xf32>
    %cst_10 = arith.constant dense<0.000000e+00> : vector<8x128xf32>
    %10 = tpu.matmul %7, %8, %cst_10 {dimension_numbers = #tpu.dot_dimension_numbers<[1], [0], [0], [1], [0, 0, 1, 1], [], []>} : vector<8x128xf32>, vector<128x128xf32>, vector<8x128xf32> -> vector<8x128xf32>
    %11 = vector.broadcast %9 : vector<1x128xf32> to vector<8x128xf32>
    %12 = arith.addf %10, %11 : vector<8x128xf32>
    %cst_11 = arith.constant 0.000000e+00 : f32
    %13 = vector.broadcast %cst_11 : f32 to vector<8x128xf32>
    %14 = arith.maximumf %12, %13 : vector<8x128xf32>
    %c0_12 = arith.constant 0 : index
    %c0_13 = arith.constant 0 : index
    %15 = vector.load %arg6[%c0_12, %c0_13] : memref<128x128xf32, #tpu.memory_space<vmem>>, vector<128x128xf32>
    %c0_14 = arith.constant 0 : index
    %c0_15 = arith.constant 0 : index
    %16 = vector.load %arg7[%c0_14, %c0_15] : memref<1x128xf32, #tpu.memory_space<vmem>>, vector<1x128xf32>
    %cst_16 = arith.constant dense<0.000000e+00> : vector<8x128xf32>
    %17 = tpu.matmul %14, %15, %cst_16 {dimension_numbers = #tpu.dot_dimension_numbers<[1], [0], [0], [1], [0, 0, 1, 1], [], []>} : vector<8x128xf32>, vector<128x128xf32>, vector<8x128xf32> -> vector<8x128xf32>
    %18 = vector.broadcast %16 : vector<1x128xf32> to vector<8x128xf32>
    %19 = arith.addf %17, %18 : vector<8x128xf32>
    %cst_17 = arith.constant 0.000000e+00 : f32
    %20 = vector.broadcast %cst_17 : f32 to vector<8x128xf32>
    %21 = arith.maximumf %19, %20 : vector<8x128xf32>
    %c0_18 = arith.constant 0 : index
    %c0_19 = arith.constant 0 : index
    %22 = vector.load %arg8[%c0_18, %c0_19] : memref<8x128xf32, #tpu.memory_space<vmem>>, vector<8x128xf32>
    tpu.vector_store %arg8[%c0_18, %c0_19], %21 {strides = array<i32>} : memref<8x128xf32, #tpu.memory_space<vmem>>, vector<8x128xf32>,
    return
  }
  func.func @transform_0(%arg0: i32) -> (i32, i32) {
    %c0_i32 = arith.constant 0 : i32
    %c0_i32_0 = arith.constant 0 : i32
    return %arg0, %c0_i32 : i32, i32
  }
  func.func @transform_1(%arg0: i32) -> (i32, i32) {
    %c0_i32 = arith.constant 0 : i32
    %c0_i32_0 = arith.constant 0 : i32
    %c0_i32_1 = arith.constant 0 : i32
    return %c0_i32, %c0_i32_0 : i32, i32
  }
  func.func @transform_2(%arg0: i32) -> (i32, i32) {
    %c0_i32 = arith.constant 0 : i32
    %c0_i32_0 = arith.constant 0 : i32
    %c0_i32_1 = arith.constant 0 : i32
    return %c0_i32, %c0_i32_0 : i32, i32
  }
  func.func @transform_3(%arg0: i32) -> (i32, i32) {
    %c0_i32 = arith.constant 0 : i32
    %c0_i32_0 = arith.constant 0 : i32
    %c0_i32_1 = arith.constant 0 : i32
    return %c0_i32, %c0_i32_0 : i32, i32
  }
  func.func @transform_4(%arg0: i32) -> (i32, i32) {
    %c0_i32 = arith.constant 0 : i32
    %c0_i32_0 = arith.constant 0 : i32
    %c0_i32_1 = arith.constant 0 : i32
    return %c0_i32, %c0_i32_0 : i32, i32
  }
  func.func @transform_5(%arg0: i32) -> (i32, i32) {
    %c0_i32 = arith.constant 0 : i32
    %c0_i32_0 = arith.constant 0 : i32
    %c0_i32_1 = arith.constant 0 : i32
    return %c0_i32, %c0_i32_0 : i32, i32
  }
  func.func @transform_6(%arg0: i32) -> (i32, i32) {
    %c0_i32 = arith.constant 0 : i32
    %c0_i32_0 = arith.constant 0 : i32
    %c0_i32_1 = arith.constant 0 : i32
    return %c0_i32, %c0_i32_0 : i32, i32
  }
  func.func @transform_7(%arg0: i32) -> (i32, i32) {
    %c0_i32 = arith.constant 0 : i32
    %c0_i32_0 = arith.constant 0 : i32
    return %arg0, %c0_i32 : i32, i32
  }
}

module attributes {stable_mosaic.version = 11 : i64} {
  func.func @_elasticnet_kernel(%arg0: i32, %arg1: memref<8x32xf32, #tpu.memory_space<vmem>>, %arg2: memref<32x128xf32, #tpu.memory_space<vmem>>, %arg3: memref<1x128xf32, #tpu.memory_space<vmem>>, %arg4: memref<128x128xf32, #tpu.memory_space<vmem>>, %arg5: memref<1x128xf32, #tpu.memory_space<vmem>>, %arg6: memref<128x128xf32, #tpu.memory_space<vmem>>, %arg7: memref<1x128xf32, #tpu.memory_space<vmem>>, %arg8: memref<8x128xf32, #tpu.memory_space<vmem>>) attributes {dimension_semantics = [#tpu.dimension_semantics<parallel>], iteration_bounds = array<i64: 1>, scalar_prefetch = 0 : i64, scratch_operands = 0 : i64, tpu.core_type = #tpu.core_type<tc>, window_params = [{transform_indices = @transform_0, window_bounds = array<i64: 8, 32>}, {pipeline_mode = #tpu.pipeline_mode<synchronous>, transform_indices = @transform_1, window_bounds = array<i64: 32, 128>}, {pipeline_mode = #tpu.pipeline_mode<synchronous>, transform_indices = @transform_2, window_bounds = array<i64: 1, 128>}, {pipeline_mode = #tpu.pipeline_mode<synchronous>, transform_indices = @transform_3, window_bounds = array<i64: 128, 128>}, {pipeline_mode = #tpu.pipeline_mode<synchronous>, transform_indices = @transform_4, window_bounds = array<i64: 1, 128>}, {pipeline_mode = #tpu.pipeline_mode<synchronous>, transform_indices = @transform_5, window_bounds = array<i64: 128, 128>}, {pipeline_mode = #tpu.pipeline_mode<synchronous>, transform_indices = @transform_6, window_bounds = array<i64: 1, 128>}, {transform_indices = @transform_7, window_bounds = array<i64: 8, 128>}]} {
    %c0 = arith.constant 0 : index
    %c0_0 = arith.constant 0 : index
    %0 = vector.load %arg1[%c0, %c0_0] : memref<8x32xf32, #tpu.memory_space<vmem>>, vector<8x32xf32>
    %c0_1 = arith.constant 0 : index
    %c0_2 = arith.constant 0 : index
    %1 = vector.load %arg2[%c0_1, %c0_2] : memref<32x128xf32, #tpu.memory_space<vmem>>, vector<32x128xf32>
    %c0_3 = arith.constant 0 : index
    %c0_4 = arith.constant 0 : index
    %2 = vector.load %arg3[%c0_3, %c0_4] : memref<1x128xf32, #tpu.memory_space<vmem>>, vector<1x128xf32>
    %cst = arith.constant dense<0.000000e+00> : vector<8x128xf32>
    %3 = tpu.matmul %0, %1, %cst {dimension_numbers = #tpu.dot_dimension_numbers<[1], [0], [0], [1], [0, 0, 1, 1], [], []>} : vector<8x32xf32>, vector<32x128xf32>, vector<8x128xf32> -> vector<8x128xf32>
    %4 = vector.broadcast %2 : vector<1x128xf32> to vector<8x128xf32>
    %5 = arith.addf %3, %4 : vector<8x128xf32>
    %cst_5 = arith.constant 0.000000e+00 : f32
    %6 = vector.broadcast %cst_5 : f32 to vector<8x128xf32>
    %7 = arith.maximumf %5, %6 : vector<8x128xf32>
    %c0_6 = arith.constant 0 : index
    %c0_7 = arith.constant 0 : index
    %8 = vector.load %arg4[%c0_6, %c0_7] : memref<128x128xf32, #tpu.memory_space<vmem>>, vector<128x128xf32>
    %c0_8 = arith.constant 0 : index
    %c0_9 = arith.constant 0 : index
    %9 = vector.load %arg5[%c0_8, %c0_9] : memref<1x128xf32, #tpu.memory_space<vmem>>, vector<1x128xf32>
    %cst_10 = arith.constant dense<0.000000e+00> : vector<8x128xf32>
    %10 = tpu.matmul %7, %8, %cst_10 {dimension_numbers = #tpu.dot_dimension_numbers<[1], [0], [0], [1], [0, 0, 1, 1], [], []>} : vector<8x128xf32>, vector<128x128xf32>, vector<8x128xf32> -> vector<8x128xf32>
    %11 = vector.broadcast %9 : vector<1x128xf32> to vector<8x128xf32>
    %12 = arith.addf %10, %11 : vector<8x128xf32>
    %cst_11 = arith.constant 0.000000e+00 : f32
    %13 = vector.broadcast %cst_11 : f32 to vector<8x128xf32>
    %14 = arith.maximumf %12, %13 : vector<8x128xf32>
    %c0_12 = arith.constant 0 : index
    %c0_13 = arith.constant 0 : index
    %15 = vector.load %arg6[%c0_12, %c0_13] : memref<128x128xf32, #tpu.memory_space<vmem>>, vector<128x128xf32>
    %c0_14 = arith.constant 0 : index
    %c0_15 = arith.constant 0 : index
    %16 = vector.load %arg7[%c0_14, %c0_15] : memref<1x128xf32, #tpu.memory_space<vmem>>, vector<1x128xf32>
    %cst_16 = arith.constant dense<0.000000e+00> : vector<8x128xf32>
    %17 = tpu.matmul %14, %15, %cst_16 {dimension_numbers = #tpu.dot_dimension_numbers<[1], [0], [0], [1], [0, 0, 1, 1], [], []>} : vector<8x128xf32>, vector<128x128xf32>, vector<8x128xf32> -> vector<8x128xf32>
    %18 = vector.broadcast %16 : vector<1x128xf32> to vector<8x128xf32>
    %19 = arith.addf %17, %18 : vector<8x128xf32>
    %cst_17 = arith.constant 0.000000e+00 : f32
    %20 = vector.broadcast %cst_17 : f32 to vector<8x128xf32>
    %21 = arith.maximumf %19, %20 : vector<8x128xf32>
    %c0_18 = arith.constant 0 : index
    %c0_19 = arith.constant 0 : index
    %22 = vector.load %arg8[%c0_18, %c0_19] : memref<8x128xf32, #tpu.memory_space<vmem>>, vector<8x128xf32>
    tpu.vector_store %arg8[%c0_18, %c0_19], %21 {strides = array<i32>} : memref<8x128xf32, #tpu.memory_space<vmem>>, vector<8x128xf32>,
    return
  }
  func.func @transform_0(%arg0: i32) -> (i32, i32) {
    %c0_i32 = arith.constant 0 : i32
    %c0_i32_0 = arith.constant 0 : i32
    return %arg0, %c0_i32 : i32, i32
  }
  func.func @transform_1(%arg0: i32) -> (i32, i32) {
    %c0_i32 = arith.constant 0 : i32
    %c0_i32_0 = arith.constant 0 : i32
    %c0_i32_1 = arith.constant 0 : i32
    return %c0_i32, %c0_i32_0 : i32, i32
  }
  func.func @transform_2(%arg0: i32) -> (i32, i32) {
    %c0_i32 = arith.constant 0 : i32
    %c0_i32_0 = arith.constant 0 : i32
    %c0_i32_1 = arith.constant 0 : i32
    return %c0_i32, %c0_i32_0 : i32, i32
  }
  func.func @transform_3(%arg0: i32) -> (i32, i32) {
    %c0_i32 = arith.constant 0 : i32
    %c0_i32_0 = arith.constant 0 : i32
    %c0_i32_1 = arith.constant 0 : i32
    return %c0_i32, %c0_i32_0 : i32, i32
  }
  func.func @transform_4(%arg0: i32) -> (i32, i32) {
    %c0_i32 = arith.constant 0 : i32
    %c0_i32_0 = arith.constant 0 : i32
    %c0_i32_1 = arith.constant 0 : i32
    return %c0_i32, %c0_i32_0 : i32, i32
  }
  func.func @transform_5(%arg0: i32) -> (i32, i32) {
    %c0_i32 = arith.constant 0 : i32
    %c0_i32_0 = arith.constant 0 : i32
    %c0_i32_1 = arith.constant 0 : i32
    return %c0_i32, %c0_i32_0 : i32, i32
  }
  func.func @transform_6(%arg0: i32) -> (i32, i32) {
    %c0_i32 = arith.constant 0 : i32
    %c0_i32_0 = arith.constant 0 : i32
    %c0_i32_1 = arith.constant 0 : i32
    return %c0_i32, %c0_i32_0 : i32, i32
  }
  func.func @transform_7(%arg0: i32) -> (i32, i32) {
    %c0_i32 = arith.constant 0 : i32
    %c0_i32_0 = arith.constant 0 : i32
    return %arg0, %c0_i32 : i32, i32
  }
}

</mosaic_0001>

<llo_original>
// kernel: _elasticnet_forward.1
$region0: #{_elasticnet_forward.1}
  #allocation0 [shape = 'u32[]', space=smem, size = 0x4, offset = 0x4, fixed_abs, tag = 'smem constant byte address 0x4 - core index']
  #allocation1 [shape = 'u32[144,128]{1,0:T(1,128)}', space=vmem, size = 0x12000, scoped, tag = 'internal scratch']
  %s0 = inlined_call_operand.hbm [shape: f32[8,32], index: 0, kind: input, shape index: {}]
  %s1 = inlined_call_operand.hbm [shape: f32[32,128], index: 1, kind: input, shape index: {}]
  %s2 = inlined_call_operand.vmem [shape: f32[1,128], index: 2, kind: input, shape index: {}]
  %s3 = inlined_call_operand.hbm [shape: f32[128,128], index: 3, kind: input, shape index: {}]
  %s4 = inlined_call_operand.vmem [shape: f32[1,128], index: 4, kind: input, shape index: {}]
  %s5 = inlined_call_operand.hbm [shape: f32[128,128], index: 5, kind: input, shape index: {}]
  %s6 = inlined_call_operand.vmem [shape: f32[1,128], index: 6, kind: input, shape index: {}]
  %s7 = inlined_call_operand.hbm [shape: f32[8,128], index: 7, kind: output, shape index: {}]
  %s8 = sld [smem:[#allocation0]]
  $region54: #{_elasticnet_forward.1} parent=0
    _
  %s10 = ssub.s32 1, %s8
  %s11 = scalar_select 0, %s10, %s8
  $region1: #{_elasticnet_forward.1} parent=0
    #allocation2 [shape = 'u8[4096]{0}', space=vmem, size = 0x1000, scoped, tag = 'input window, operand 0, single buffered']
    #allocation3 [shape = 's32[1]{0}', space=sflag, size = 0x4, scoped, tag = 'scoped memory for _elasticnet_forward.1']
    #allocation4 [shape = 's32[1]{0}', space=sflag, size = 0x4, scoped, tag = 'scoped memory for _elasticnet_forward.1']
    #allocation5 [shape = 'u8[16384]{0}', space=vmem, size = 0x4000, scoped, tag = 'input window, operand 1, single buffered']
    #allocation6 [shape = 's32[1]{0}', space=sflag, size = 0x4, scoped, tag = 'scoped memory for _elasticnet_forward.1']
    #allocation7 [shape = 'u8[65536]{0}', space=vmem, size = 0x10000, scoped, tag = 'input window, operand 3, single buffered']
    #allocation8 [shape = 'u8[65536]{0}', space=vmem, size = 0x10000, scoped, tag = 'input window, operand 5, single buffered']
    #allocation9 [shape = 's32[1]{0}', space=sflag, size = 0x4, scoped, tag = 'scoped memory for _elasticnet_forward.1']
    #allocation10 [shape = 'u8[4096]{0}', space=vmem, size = 0x1000, scoped, tag = 'output window, operand 0, single buffered']
    %12 = vsyncpa [#allocation3], 0
    %13 = vsyncpa [#allocation6], 0
    %14 = vsyncpa [#allocation9], 0
    %15 = vsyncpa [#allocation4], 0
    // Predicated region
    $region2: #{_elasticnet_forward.1} parent=1 // pred_check
      _
    $region3: #{_elasticnet_forward.1} parent=1 // pred_check_branch
      %17 = sbr.rel (0) target = $region5
    $region4: #{_elasticnet_forward.1} parent=1 // pred_region
      %s19 = ssub.s32 128, 128
      %20 = vsyncadd [#allocation3], %s19
      %s22 = sshll.u32 [#allocation2], 4
      %s23 = int_to_ptr.vmem [resolvable:$true] %s22
      %25 = dma.hbm_to_vmem [thread:$0]  %s0, 128, %s23, [#allocation3]
    $region5: #{_elasticnet_forward.1} parent=1 // pred_fallthru
      _
    // Predicated region
    $region6: #{_elasticnet_forward.1} parent=1 // pred_check
      _
    $region7: #{_elasticnet_forward.1} parent=1 // pred_check_branch
      %27 = sbr.rel (0) target = $region9
    $region8: #{_elasticnet_forward.1} parent=1 // pred_region
      %s29 = ssub.s32 512, 512
      %30 = vsyncadd [#allocation6], %s29
      %s31 = sshll.u32 [#allocation5], 4
      %s32 = int_to_ptr.vmem [resolvable:$true] %s31
      %37 = dma.hbm_to_vmem [thread:$0]  %s1, 512, %s32, [#allocation6], 128, 128, 8
    $region9: #{_elasticnet_forward.1} parent=1 // pred_fallthru
      _
    // Predicated region
    $region10: #{_elasticnet_forward.1} parent=1 // pred_check
      _
    $region11: #{_elasticnet_forward.1} parent=1 // pred_check_branch
      %39 = sbr.rel (0) target = $region13
    $region12: #{_elasticnet_forward.1} parent=1 // pred_region
      _
    $region13: #{_elasticnet_forward.1} parent=1 // pred_fallthru
      _
    // Predicated region
    $region14: #{_elasticnet_forward.1} parent=1 // pred_check
      _
    $region15: #{_elasticnet_forward.1} parent=1 // pred_check_branch
      %41 = sbr.rel (0) target = $region17
    $region16: #{_elasticnet_forward.1} parent=1 // pred_region
      %s43 = ssub.s32 2048, 2048
      %44 = vsyncadd [#allocation6], %s43
      %s45 = sshll.u32 [#allocation7], 4
      %s46 = int_to_ptr.vmem [resolvable:$true] %s45
      %51 = dma.hbm_to_vmem [thread:$0]  %s3, 2048, %s46, [#allocation6], 128, 128, 8
    $region17: #{_elasticnet_forward.1} parent=1 // pred_fallthru
      _
    // Predicated region
    $region18: #{_elasticnet_forward.1} parent=1 // pred_check
      _
    $region19: #{_elasticnet_forward.1} parent=1 // pred_check_branch
      %53 = sbr.rel (0) target = $region21
    $region20: #{_elasticnet_forward.1} parent=1 // pred_region
      _
    $region21: #{_elasticnet_forward.1} parent=1 // pred_fallthru
      _
    // Predicated region
    $region22: #{_elasticnet_forward.1} parent=1 // pred_check
      _
    $region23: #{_elasticnet_forward.1} parent=1 // pred_check_branch
      %55 = sbr.rel (0) target = $region25
    $region24: #{_elasticnet_forward.1} parent=1 // pred_region
      %s57 = ssub.s32 2048, 2048
      %58 = vsyncadd [#allocation9], %s57
      %s59 = sshll.u32 [#allocation8], 4
      %s60 = int_to_ptr.vmem [resolvable:$true] %s59
      %65 = dma.hbm_to_vmem [thread:$0]  %s5, 2048, %s60, [#allocation9], 128, 128, 8
    $region25: #{_elasticnet_forward.1} parent=1 // pred_fallthru
      _
    // Predicated region
    $region26: #{_elasticnet_forward.1} parent=1 // pred_check
      _
    $region27: #{_elasticnet_forward.1} parent=1 // pred_check_branch
      %67 = sbr.rel (0) target = $region29
    $region28: #{_elasticnet_forward.1} parent=1 // pred_region
      _
    $region29: #{_elasticnet_forward.1} parent=1 // pred_fallthru
      _
    // Predicated region
    $region30: #{_elasticnet_forward.1} parent=1 // pred_check
      _
    $region31: #{_elasticnet_forward.1} parent=1 // pred_check_branch
      %69 = sbr.rel (0) target = $region33
    $region32: #{_elasticnet_forward.1} parent=1 // pred_region
      %70 = dma.done [#allocation3], 128
    $region33: #{_elasticnet_forward.1} parent=1 // pred_fallthru
      _
    // Predicated region
    $region34: #{_elasticnet_forward.1} parent=1 // pred_check
      _
    $region35: #{_elasticnet_forward.1} parent=1 // pred_check_branch
      %72 = sbr.rel (0) target = $region37
    $region36: #{_elasticnet_forward.1} parent=1 // pred_region
      %73 = dma.done [#allocation6], 512
    $region37: #{_elasticnet_forward.1} parent=1 // pred_fallthru
      _
    // Predicated region
    $region38: #{_elasticnet_forward.1} parent=1 // pred_check
      _
    $region39: #{_elasticnet_forward.1} parent=1 // pred_check_branch
      %75 = sbr.rel (0) target = $region41
    $region40: #{_elasticnet_forward.1} parent=1 // pred_region
      %76 = dma.done [#allocation6], 2048
    $region41: #{_elasticnet_forward.1} parent=1 // pred_fallthru
      _
    // Predicated region
    $region42: #{_elasticnet_forward.1} parent=1 // pred_check
      _
    $region43: #{_elasticnet_forward.1} parent=1 // pred_check_branch
      %78 = sbr.rel (0) target = $region45
    $region44: #{_elasticnet_forward.1} parent=1 // pred_region
      %79 = dma.done [#allocation9], 2048
    $region45: #{_elasticnet_forward.1} parent=1 // pred_fallthru
      _
    %v80 = vld [vmem:[#allocation2] sm:$0xff]
    %v81 = vld [vmem:[#allocation5] sm:$0xff]
    %v82 = vld [vmem:[#allocation5 + $0x8] sm:$0xff]
    %v83 = vld [vmem:[#allocation5 + $0x10] sm:$0xff]
    %v84 = vld [vmem:[#allocation5 + $0x18] sm:$0xff]
    %v85 = vld [vmem:[%s2] sm:$0x1]
    %v87 = vlaneseq
    %v88 = vshrl.u32 %v87, 7
    %v89 = vsub.s32 0, %v88
    %v90 = vrot.slane %v85, %v89
    %vm92 = vcmask 261120
    %v94 = vsel %vm92, %v80, 0
    %96 = vmatprep.subr.mxu0 0.0
    %97 = vmatpush1.msra.mxu0 0.0
    %98 = vmatprep.subr.mxu0 0.0
    %99 = vmatpush1.msra.mxu0 0.0
    %100 = vmatprep.subr.mxu0 0.0
    %101 = vmatpush1.msra.mxu0 0.0
    %102 = vmatprep.subr.mxu0 0.0
    %103 = vmatpush1.msra.mxu0 0.0
    %104 = vmatprep.subr.mxu0 0.0
    %105 = vmatpush1.msra.mxu0 0.0
    %106 = vmatprep.subr.mxu0 0.0
    %107 = vmatpush1.msra.mxu0 0.0
    %108 = vmatprep.subr.mxu0 0.0
    %109 = vmatpush1.msra.mxu0 0.0
    %110 = vmatprep.subr.mxu0 0.0
    %111 = vmatpush1.msra.mxu0 0.0
    %112 = vmatprep.subr.mxu0 0.0
    %113 = vmatpush1.msra.mxu0 0.0
    %114 = vmatprep.subr.mxu0 0.0
    %115 = vmatpush1.msra.mxu0 0.0
    %116 = vmatprep.subr.mxu0 0.0
    %117 = vmatpush1.msra.mxu0 0.0
    %118 = vmatprep.subr.mxu0 0.0
    %119 = vmatpush1.msra.mxu0 0.0
    %120 = vmatprep.subr.mxu0 0.0
    %121 = vmatpush1.msra.mxu0 %v84
    %122 = vmatprep.subr.mxu0 0.0
    %123 = vmatpush1.msra.mxu0 %v83
    %124 = vmatprep.subr.mxu0 0.0
    %125 = vmatpush1.msra.mxu0 %v82
    %126 = vmatprep.subr.mxu0 0.0
    %127 = vmatpush1.msra.mxu0 %v81
    %128 = vmatprep.subr.mxu0 0.0
    %129 = vmatpush2.msra.mxu0 0.0
    %130 = vmatprep.subr.mxu0 0.0
    %131 = vmatpush2.msra.mxu0 0.0
    %132 = vmatprep.subr.mxu0 0.0
    %133 = vmatpush2.msra.mxu0 0.0
    %134 = vmatprep.subr.mxu0 0.0
    %135 = vmatpush2.msra.mxu0 0.0
    %136 = vmatprep.subr.mxu0 0.0
    %137 = vmatpush2.msra.mxu0 0.0
    %138 = vmatprep.subr.mxu0 0.0
    %139 = vmatpush2.msra.mxu0 0.0
    %140 = vmatprep.subr.mxu0 0.0
    %141 = vmatpush2.msra.mxu0 0.0
    %142 = vmatprep.subr.mxu0 0.0
    %143 = vmatpush2.msra.mxu0 0.0
    %144 = vmatprep.subr.mxu0 0.0
    %145 = vmatpush2.msra.mxu0 0.0
    %146 = vmatprep.subr.mxu0 0.0
    %147 = vmatpush2.msra.mxu0 0.0
    %148 = vmatprep.subr.mxu0 0.0
    %149 = vmatpush2.msra.mxu0 0.0
    %150 = vmatprep.subr.mxu0 0.0
    %151 = vmatpush2.msra.mxu0 0.0
    %152 = vmatprep.subr.mxu0 0.0
    %153 = vmatpush2.msra.mxu0 0.0
    %154 = vmatprep.subr.mxu0 0.0
    %155 = vmatpush2.msra.mxu0 0.0
    %156 = vmatprep.subr.mxu0 0.0
    %157 = vmatpush2.msra.mxu0 0.0
    %158 = vmatprep.subr.mxu0 0.0
    %159 = vmatpush2.msra.mxu0 0.0
    %160 = vmatprep.mubr.f32.mxu0 0.0
    %161 = vmatmul.mubr.f32.gmra.mxu0 %v94
    %v162 = vpop.f32.mrf.mxu0
    %v163 = vadd.f32 %v90, %v162
    %v164 = vpop.f32.mrf.mxu0
    %165 = vdwg.mxu0
    %v166 = vmax.f32 %v163, 0.0
    %v167 = vld [vmem:[#allocation7] sm:$0xff]
    %v168 = vld [vmem:[#allocation7 + $0x8] sm:$0xff]
    %v169 = vld [vmem:[#allocation7 + $0x10] sm:$0xff]
    %v170 = vld [vmem:[#allocation7 + $0x18] sm:$0xff]
    %v171 = vld [vmem:[#allocation7 + $0x20] sm:$0xff]
    %v172 = vld [vmem:[#allocation7 + $0x28] sm:$0xff]
    %v173 = vld [vmem:[#allocation7 + $0x30] sm:$0xff]
    %v174 = vld [vmem:[#allocation7 + $0x38] sm:$0xff]
    %v175 = vld [vmem:[#allocation7 + $0x40] sm:$0xff]
    %v176 = vld [vmem:[#allocation7 + $0x48] sm:$0xff]
    %v177 = vld [vmem:[#allocation7 + $0x50] sm:$0xff]
    %v178 = vld [vmem:[#allocation7 + $0x58] sm:$0xff]
    %v179 = vld [vmem:[#allocation7 + $0x60] sm:$0xff]
    %v180 = vld [vmem:[#allocation7 + $0x68] sm:$0xff]
    %v181 = vld [vmem:[#allocation7 + $0x70] sm:$0xff]
    %v182 = vld [vmem:[#allocation7 + $0x78] sm:$0xff]
    %v183 = vld [vmem:[%s4] sm:$0x1]
    %v185 = vlaneseq
    %v186 = vshrl.u32 %v185, 7
    %v187 = vsub.s32 0, %v186
    %v188 = vrot.slane %v183, %v187
    %190 = vmatprep.subr.mxu0 0.0
    %191 = vmatpush1.msra.mxu0 %v182
    %192 = vmatprep.subr.mxu0 0.0
    %193 = vmatpush1.msra.mxu0 %v181
    %194 = vmatprep.subr.mxu0 0.0
    %195 = vmatpush1.msra.mxu0 %v180
    %196 = vmatprep.subr.mxu0 0.0
    %197 = vmatpush1.msra.mxu0 %v179
    %198 = vmatprep.subr.mxu0 0.0
    %199 = vmatpush1.msra.mxu0 %v178
    %200 = vmatprep.subr.mxu0 0.0
    %201 = vmatpush1.msra.mxu0 %v177
    %202 = vmatprep.subr.mxu0 0.0
    %203 = vmatpush1.msra.mxu0 %v176
    %204 = vmatprep.subr.mxu0 0.0
    %205 = vmatpush1.msra.mxu0 %v175
    %206 = vmatprep.subr.mxu0 0.0
    %207 = vmatpush1.msra.mxu0 %v174
    %208 = vmatprep.subr.mxu0 0.0
    %209 = vmatpush1.msra.mxu0 %v173
    %210 = vmatprep.subr.mxu0 0.0
    %211 = vmatpush1.msra.mxu0 %v172
    %212 = vmatprep.subr.mxu0 0.0
    %213 = vmatpush1.msra.mxu0 %v171
    %214 = vmatprep.subr.mxu0 0.0
    %215 = vmatpush1.msra.mxu0 %v170
    %216 = vmatprep.subr.mxu0 0.0
    %217 = vmatpush1.msra.mxu0 %v169
    %218 = vmatprep.subr.mxu0 0.0
    %219 = vmatpush1.msra.mxu0 %v168
    %220 = vmatprep.subr.mxu0 0.0
    %221 = vmatpush1.msra.mxu0 %v167
    %222 = vmatprep.subr.mxu0 0.0
    %223 = vmatpush2.msra.mxu0 0.0
    %224 = vmatprep.subr.mxu0 0.0
    %225 = vmatpush2.msra.mxu0 0.0
    %226 = vmatprep.subr.mxu0 0.0
    %227 = vmatpush2.msra.mxu0 0.0
    %228 = vmatprep.subr.mxu0 0.0
    %229 = vmatpush2.msra.mxu0 0.0
    %230 = vmatprep.subr.mxu0 0.0
    %231 = vmatpush2.msra.mxu0 0.0
    %232 = vmatprep.subr.mxu0 0.0
    %233 = vmatpush2.msra.mxu0 0.0
    %234 = vmatprep.subr.mxu0 0.0
    %235 = vmatpush2.msra.mxu0 0.0
    %236 = vmatprep.subr.mxu0 0.0
    %237 = vmatpush2.msra.mxu0 0.0
    %238 = vmatprep.subr.mxu0 0.0
    %239 = vmatpush2.msra.mxu0 0.0
    %240 = vmatprep.subr.mxu0 0.0
    %241 = vmatpush2.msra.mxu0 0.0
    %242 = vmatprep.subr.mxu0 0.0
    %243 = vmatpush2.msra.mxu0 0.0
    %244 = vmatprep.subr.mxu0 0.0
    %245 = vmatpush2.msra.mxu0 0.0
    %246 = vmatprep.subr.mxu0 0.0
    %247 = vmatpush2.msra.mxu0 0.0
    %248 = vmatprep.subr.mxu0 0.0
    %249 = vmatpush2.msra.mxu0 0.0
    %250 = vmatprep.subr.mxu0 0.0
    %251 = vmatpush2.msra.mxu0 0.0
    %252 = vmatprep.subr.mxu0 0.0
    %253 = vmatpush2.msra.mxu0 0.0
    %254 = vmatprep.mubr.f32.mxu0 0.0
    %255 = vmatmul.mubr.f32.gmra.mxu0 %v166
    %v256 = vpop.f32.mrf.mxu0
    %v257 = vadd.f32 %v188, %v256
    %v258 = vpop.f32.mrf.mxu0
    %259 = vdwg.mxu0
    %v260 = vmax.f32 %v257, 0.0
    %v261 = vld [vmem:[#allocation8] sm:$0xff]
    %v262 = vld [vmem:[#allocation8 + $0x8] sm:$0xff]
    %v263 = vld [vmem:[#allocation8 + $0x10] sm:$0xff]
    %v264 = vld [vmem:[#allocation8 + $0x18] sm:$0xff]
    %v265 = vld [vmem:[#allocation8 + $0x20] sm:$0xff]
    %v266 = vld [vmem:[#allocation8 + $0x28] sm:$0xff]
    %v267 = vld [vmem:[#allocation8 + $0x30] sm:$0xff]
    %v268 = vld [vmem:[#allocation8 + $0x38] sm:$0xff]
    %v269 = vld [vmem:[#allocation8 + $0x40] sm:$0xff]
    %v270 = vld [vmem:[#allocation8 + $0x48] sm:$0xff]
    %v271 = vld [vmem:[#allocation8 + $0x50] sm:$0xff]
    %v272 = vld [vmem:[#allocation8 + $0x58] sm:$0xff]
    %v273 = vld [vmem:[#allocation8 + $0x60] sm:$0xff]
    %v274 = vld [vmem:[#allocation8 + $0x68] sm:$0xff]
    %v275 = vld [vmem:[#allocation8 + $0x70] sm:$0xff]
    %v276 = vld [vmem:[#allocation8 + $0x78] sm:$0xff]
    %v277 = vld [vmem:[%s6] sm:$0x1]
    %v279 = vlaneseq
    %v280 = vshrl.u32 %v279, 7
    %v281 = vsub.s32 0, %v280
    %v282 = vrot.slane %v277, %v281
    %284 = vmatprep.subr.mxu0 0.0
    %285 = vmatpush1.msra.mxu0 %v276
    %286 = vmatprep.subr.mxu0 0.0
    %287 = vmatpush1.msra.mxu0 %v275
    %288 = vmatprep.subr.mxu0 0.0
    %289 = vmatpush1.msra.mxu0 %v274
    %290 = vmatprep.subr.mxu0 0.0
    %291 = vmatpush1.msra.mxu0 %v273
    %292 = vmatprep.subr.mxu0 0.0
    %293 = vmatpush1.msra.mxu0 %v272
    %294 = vmatprep.subr.mxu0 0.0
    %295 = vmatpush1.msra.mxu0 %v271
    %296 = vmatprep.subr.mxu0 0.0
    %297 = vmatpush1.msra.mxu0 %v270
    %298 = vmatprep.subr.mxu0 0.0
    %299 = vmatpush1.msra.mxu0 %v269
    %300 = vmatprep.subr.mxu0 0.0
    %301 = vmatpush1.msra.mxu0 %v268
    %302 = vmatprep.subr.mxu0 0.0
    %303 = vmatpush1.msra.mxu0 %v267
    %304 = vmatprep.subr.mxu0 0.0
    %305 = vmatpush1.msra.mxu0 %v266
    %306 = vmatprep.subr.mxu0 0.0
    %307 = vmatpush1.msra.mxu0 %v265
    %308 = vmatprep.subr.mxu0 0.0
    %309 = vmatpush1.msra.mxu0 %v264
    %310 = vmatprep.subr.mxu0 0.0
    %311 = vmatpush1.msra.mxu0 %v263
    %312 = vmatprep.subr.mxu0 0.0
    %313 = vmatpush1.msra.mxu0 %v262
    %314 = vmatprep.subr.mxu0 0.0
    %315 = vmatpush1.msra.mxu0 %v261
    %316 = vmatprep.subr.mxu0 0.0
    %317 = vmatpush2.msra.mxu0 0.0
    %318 = vmatprep.subr.mxu0 0.0
    %319 = vmatpush2.msra.mxu0 0.0
    %320 = vmatprep.subr.mxu0 0.0
    %321 = vmatpush2.msra.mxu0 0.0
    %322 = vmatprep.subr.mxu0 0.0
    %323 = vmatpush2.msra.mxu0 0.0
    %324 = vmatprep.subr.mxu0 0.0
    %325 = vmatpush2.msra.mxu0 0.0
    %326 = vmatprep.subr.mxu0 0.0
    %327 = vmatpush2.msra.mxu0 0.0
    %328 = vmatprep.subr.mxu0 0.0
    %329 = vmatpush2.msra.mxu0 0.0
    %330 = vmatprep.subr.mxu0 0.0
    %331 = vmatpush2.msra.mxu0 0.0
    %332 = vmatprep.subr.mxu0 0.0
    %333 = vmatpush2.msra.mxu0 0.0
    %334 = vmatprep.subr.mxu0 0.0
    %335 = vmatpush2.msra.mxu0 0.0
    %336 = vmatprep.subr.mxu0 0.0
    %337 = vmatpush2.msra.mxu0 0.0
    %338 = vmatprep.subr.mxu0 0.0
    %339 = vmatpush2.msra.mxu0 0.0
    %340 = vmatprep.subr.mxu0 0.0
    %341 = vmatpush2.msra.mxu0 0.0
    %342 = vmatprep.subr.mxu0 0.0
    %343 = vmatpush2.msra.mxu0 0.0
    %344 = vmatprep.subr.mxu0 0.0
    %345 = vmatpush2.msra.mxu0 0.0
    %346 = vmatprep.subr.mxu0 0.0
    %347 = vmatpush2.msra.mxu0 0.0
    %348 = vmatprep.mubr.f32.mxu0 0.0
    %349 = vmatmul.mubr.f32.gmra.mxu0 %v260
    %v350 = vpop.f32.mrf.mxu0
    %v351 = vadd.f32 %v282, %v350
    %v352 = vpop.f32.mrf.mxu0
    %353 = vdwg.mxu0
    %v354 = vmax.f32 %v351, 0.0
    %355 = vst [vmem:[#allocation10] sm:$0xff] %v354
    // Predicated region
    $region46: #{_elasticnet_forward.1} parent=1 // pred_check
      _
    $region47: #{_elasticnet_forward.1} parent=1 // pred_check_branch
      %357 = sbr.rel (0) target = $region49
    $region48: #{_elasticnet_forward.1} parent=1 // pred_region
      %s359 = ssub.s32 128, 128
      %360 = vsyncadd [#allocation4], %s359
      %s362 = sshll.u32 [#allocation10], 4
      %s363 = int_to_ptr.vmem [resolvable:$true] %s362
      %365 = dma.vmem_to_hbm [thread:$0]  %s363, 128, %s7, [#allocation4]
    $region49: #{_elasticnet_forward.1} parent=1 // pred_fallthru
      _
    // Predicated region
    $region50: #{_elasticnet_forward.1} parent=1 // pred_check
      _
    $region51: #{_elasticnet_forward.1} parent=1 // pred_check_branch
      %367 = sbr.rel (0) target = $region53
    $region52: #{_elasticnet_forward.1} parent=1 // pred_region
      %368 = dma.done [#allocation4], 128
    $region53: #{_elasticnet_forward.1} parent=1 // pred_fallthru
      _
    %369 = vsyncpa [#allocation3], 1
    %370 = vsyncpa [#allocation6], 1
    %371 = vsyncpa [#allocation9], 1
    %372 = vsyncpa [#allocation4], 1

// kernel: _elasticnet_forward.1
$region0: #{_elasticnet_forward.1}
  #allocation0 [shape = 'u32[]', space=smem, size = 0x4, offset = 0x4, fixed_abs, tag = 'smem constant byte address 0x4 - core index']
  #allocation1 [shape = 'u32[144,128]{1,0:T(1,128)}', space=vmem, size = 0x12000, scoped, tag = 'internal scratch']
  %s0 = inlined_call_operand.hbm [shape: f32[8,32], index: 0, kind: input, shape index: {}]
  %s1 = inlined_call_operand.hbm [shape: f32[32,128], index: 1, kind: input, shape index: {}]
  %s2 = inlined_call_operand.vmem [shape: f32[1,128], index: 2, kind: input, shape index: {}]
  %s3 = inlined_call_operand.hbm [shape: f32[128,128], index: 3, kind: input, shape index: {}]
  %s4 = inlined_call_operand.vmem [shape: f32[1,128], index: 4, kind: input, shape index: {}]
  %s5 = inlined_call_operand.hbm [shape: f32[128,128], index: 5, kind: input, shape index: {}]
  %s6 = inlined_call_operand.vmem [shape: f32[1,128], index: 6, kind: input, shape index: {}]
  %s7 = inlined_call_operand.hbm [shape: f32[8,128], index: 7, kind: output, shape index: {}]
  %s8 = sld [smem:[#allocation0]]
  $region54: #{_elasticnet_forward.1} parent=0
    _
  %s10 = ssub.s32 1, %s8
  %s11 = scalar_select 0, %s10, %s8
  $region1: #{_elasticnet_forward.1} parent=0
    #allocation2 [shape = 'u8[4096]{0}', space=vmem, size = 0x1000, scoped, tag = 'input window, operand 0, single buffered']
    #allocation3 [shape = 's32[1]{0}', space=sflag, size = 0x4, scoped, tag = 'scoped memory for _elasticnet_forward.1']
    #allocation4 [shape = 's32[1]{0}', space=sflag, size = 0x4, scoped, tag = 'scoped memory for _elasticnet_forward.1']
    #allocation5 [shape = 'u8[16384]{0}', space=vmem, size = 0x4000, scoped, tag = 'input window, operand 1, single buffered']
    #allocation6 [shape = 's32[1]{0}', space=sflag, size = 0x4, scoped, tag = 'scoped memory for _elasticnet_forward.1']
    #allocation7 [shape = 'u8[65536]{0}', space=vmem, size = 0x10000, scoped, tag = 'input window, operand 3, single buffered']
    #allocation8 [shape = 'u8[65536]{0}', space=vmem, size = 0x10000, scoped, tag = 'input window, operand 5, single buffered']
    #allocation9 [shape = 's32[1]{0}', space=sflag, size = 0x4, scoped, tag = 'scoped memory for _elasticnet_forward.1']
    #allocation10 [shape = 'u8[4096]{0}', space=vmem, size = 0x1000, scoped, tag = 'output window, operand 0, single buffered']
    %12 = vsyncpa [#allocation3], 0
    %13 = vsyncpa [#allocation6], 0
    %14 = vsyncpa [#allocation9], 0
    %15 = vsyncpa [#allocation4], 0
    // Predicated region
    $region2: #{_elasticnet_forward.1} parent=1 // pred_check
      _
    $region3: #{_elasticnet_forward.1} parent=1 // pred_check_branch
      %17 = sbr.rel (0) target = $region5
    $region4: #{_elasticnet_forward.1} parent=1 // pred_region
      %s19 = ssub.s32 128, 128
      %20 = vsyncadd [#allocation3], %s19
      %s22 = sshll.u32 [#allocation2], 4
      %s23 = int_to_ptr.vmem [resolvable:$true] %s22
      %25 = dma.hbm_to_vmem [thread:$0]  %s0, 128, %s23, [#allocation3]
    $region5: #{_elasticnet_forward.1} parent=1 // pred_fallthru
      _
    // Predicated region
    $region6: #{_elasticnet_forward.1} parent=1 // pred_check
      _
    $region7: #{_elasticnet_forward.1} parent=1 // pred_check_branch
      %27 = sbr.rel (0) target = $region9
    $region8: #{_elasticnet_forward.1} parent=1 // pred_region
      %s29 = ssub.s32 512, 512
      %30 = vsyncadd [#allocation6], %s29
      %s31 = sshll.u32 [#allocation5], 4
      %s32 = int_to_ptr.vmem [resolvable:$true] %s31
      %37 = dma.hbm_to_vmem [thread:$0]  %s1, 512, %s32, [#allocation6], 128, 128, 8
    $region9: #{_elasticnet_forward.1} parent=1 // pred_fallthru
      _
    // Predicated region
    $region10: #{_elasticnet_forward.1} parent=1 // pred_check
      _
    $region11: #{_elasticnet_forward.1} parent=1 // pred_check_branch
      %39 = sbr.rel (0) target = $region13
    $region12: #{_elasticnet_forward.1} parent=1 // pred_region
      _
    $region13: #{_elasticnet_forward.1} parent=1 // pred_fallthru
      _
    // Predicated region
    $region14: #{_elasticnet_forward.1} parent=1 // pred_check
      _
    $region15: #{_elasticnet_forward.1} parent=1 // pred_check_branch
      %41 = sbr.rel (0) target = $region17
    $region16: #{_elasticnet_forward.1} parent=1 // pred_region
      %s43 = ssub.s32 2048, 2048
      %44 = vsyncadd [#allocation6], %s43
      %s45 = sshll.u32 [#allocation7], 4
      %s46 = int_to_ptr.vmem [resolvable:$true] %s45
      %51 = dma.hbm_to_vmem [thread:$0]  %s3, 2048, %s46, [#allocation6], 128, 128, 8
    $region17: #{_elasticnet_forward.1} parent=1 // pred_fallthru
      _
    // Predicated region
    $region18: #{_elasticnet_forward.1} parent=1 // pred_check
      _
    $region19: #{_elasticnet_forward.1} parent=1 // pred_check_branch
      %53 = sbr.rel (0) target = $region21
    $region20: #{_elasticnet_forward.1} parent=1 // pred_region
      _
    $region21: #{_elasticnet_forward.1} parent=1 // pred_fallthru
      _
    // Predicated region
    $region22: #{_elasticnet_forward.1} parent=1 // pred_check
      _
    $region23: #{_elasticnet_forward.1} parent=1 // pred_check_branch
      %55 = sbr.rel (0) target = $region25
    $region24: #{_elasticnet_forward.1} parent=1 // pred_region
      %s57 = ssub.s32 2048, 2048
      %58 = vsyncadd [#allocation9], %s57
      %s59 = sshll.u32 [#allocation8], 4
      %s60 = int_to_ptr.vmem [resolvable:$true] %s59
      %65 = dma.hbm_to_vmem [thread:$0]  %s5, 2048, %s60, [#allocation9], 128, 128, 8
    $region25: #{_elasticnet_forward.1} parent=1 // pred_fallthru
      _
    // Predicated region
    $region26: #{_elasticnet_forward.1} parent=1 // pred_check
      _
    $region27: #{_elasticnet_forward.1} parent=1 // pred_check_branch
      %67 = sbr.rel (0) target = $region29
    $region28: #{_elasticnet_forward.1} parent=1 // pred_region
      _
    $region29: #{_elasticnet_forward.1} parent=1 // pred_fallthru
      _
    // Predicated region
    $region30: #{_elasticnet_forward.1} parent=1 // pred_check
      _
    $region31: #{_elasticnet_forward.1} parent=1 // pred_check_branch
      %69 = sbr.rel (0) target = $region33
    $region32: #{_elasticnet_forward.1} parent=1 // pred_region
      %70 = dma.done [#allocation3], 128
    $region33: #{_elasticnet_forward.1} parent=1 // pred_fallthru
      _
    // Predicated region
    $region34: #{_elasticnet_forward.1} parent=1 // pred_check
      _
    $region35: #{_elasticnet_forward.1} parent=1 // pred_check_branch
      %72 = sbr.rel (0) target = $region37
    $region36: #{_elasticnet_forward.1} parent=1 // pred_region
      %73 = dma.done [#allocation6], 512
    $region37: #{_elasticnet_forward.1} parent=1 // pred_fallthru
      _
    // Predicated region
    $region38: #{_elasticnet_forward.1} parent=1 // pred_check
      _
    $region39: #{_elasticnet_forward.1} parent=1 // pred_check_branch
      %75 = sbr.rel (0) target = $region41
    $region40: #{_elasticnet_forward.1} parent=1 // pred_region
      %76 = dma.done [#allocation6], 2048
    $region41: #{_elasticnet_forward.1} parent=1 // pred_fallthru
      _
    // Predicated region
    $region42: #{_elasticnet_forward.1} parent=1 // pred_check
      _
    $region43: #{_elasticnet_forward.1} parent=1 // pred_check_branch
      %78 = sbr.rel (0) target = $region45
    $region44: #{_elasticnet_forward.1} parent=1 // pred_region
      %79 = dma.done [#allocation9], 2048
    $region45: #{_elasticnet_forward.1} parent=1 // pred_fallthru
      _
    %v80 = vld [vmem:[#allocation2] sm:$0xff]
    %v81 = vld [vmem:[#allocation5] sm:$0xff]
    %v82 = vld [vmem:[#allocation5 + $0x8] sm:$0xff]
    %v83 = vld [vmem:[#allocation5 + $0x10] sm:$0xff]
    %v84 = vld [vmem:[#allocation5 + $0x18] sm:$0xff]
    %v85 = vld [vmem:[%s2] sm:$0x1]
    %v87 = vlaneseq
    %v88 = vshrl.u32 %v87, 7
    %v89 = vsub.s32 0, %v88
    %v90 = vrot.slane %v85, %v89
    %vm92 = vcmask 261120
    %v94 = vsel %vm92, %v80, 0
    %96 = vmatprep.subr.mxu0 0.0
    %97 = vmatpush1.msra.mxu0 0.0
    %98 = vmatprep.subr.mxu0 0.0
    %99 = vmatpush1.msra.mxu0 0.0
    %100 = vmatprep.subr.mxu0 0.0
    %101 = vmatpush1.msra.mxu0 0.0
    %102 = vmatprep.subr.mxu0 0.0
    %103 = vmatpush1.msra.mxu0 0.0
    %104 = vmatprep.subr.mxu0 0.0
    %105 = vmatpush1.msra.mxu0 0.0
    %106 = vmatprep.subr.mxu0 0.0
    %107 = vmatpush1.msra.mxu0 0.0
    %108 = vmatprep.subr.mxu0 0.0
    %109 = vmatpush1.msra.mxu0 0.0
    %110 = vmatprep.subr.mxu0 0.0
    %111 = vmatpush1.msra.mxu0 0.0
    %112 = vmatprep.subr.mxu0 0.0
    %113 = vmatpush1.msra.mxu0 0.0
    %114 = vmatprep.subr.mxu0 0.0
    %115 = vmatpush1.msra.mxu0 0.0
    %116 = vmatprep.subr.mxu0 0.0
    %117 = vmatpush1.msra.mxu0 0.0
    %118 = vmatprep.subr.mxu0 0.0
    %119 = vmatpush1.msra.mxu0 0.0
    %120 = vmatprep.subr.mxu0 0.0
    %121 = vmatpush1.msra.mxu0 %v84
    %122 = vmatprep.subr.mxu0 0.0
    %123 = vmatpush1.msra.mxu0 %v83
    %124 = vmatprep.subr.mxu0 0.0
    %125 = vmatpush1.msra.mxu0 %v82
    %126 = vmatprep.subr.mxu0 0.0
    %127 = vmatpush1.msra.mxu0 %v81
    %128 = vmatprep.subr.mxu0 0.0
    %129 = vmatpush2.msra.mxu0 0.0
    %130 = vmatprep.subr.mxu0 0.0
    %131 = vmatpush2.msra.mxu0 0.0
    %132 = vmatprep.subr.mxu0 0.0
    %133 = vmatpush2.msra.mxu0 0.0
    %134 = vmatprep.subr.mxu0 0.0
    %135 = vmatpush2.msra.mxu0 0.0
    %136 = vmatprep.subr.mxu0 0.0
    %137 = vmatpush2.msra.mxu0 0.0
    %138 = vmatprep.subr.mxu0 0.0
    %139 = vmatpush2.msra.mxu0 0.0
    %140 = vmatprep.subr.mxu0 0.0
    %141 = vmatpush2.msra.mxu0 0.0
    %142 = vmatprep.subr.mxu0 0.0
    %143 = vmatpush2.msra.mxu0 0.0
    %144 = vmatprep.subr.mxu0 0.0
    %145 = vmatpush2.msra.mxu0 0.0
    %146 = vmatprep.subr.mxu0 0.0
    %147 = vmatpush2.msra.mxu0 0.0
    %148 = vmatprep.subr.mxu0 0.0
    %149 = vmatpush2.msra.mxu0 0.0
    %150 = vmatprep.subr.mxu0 0.0
    %151 = vmatpush2.msra.mxu0 0.0
    %152 = vmatprep.subr.mxu0 0.0
    %153 = vmatpush2.msra.mxu0 0.0
    %154 = vmatprep.subr.mxu0 0.0
    %155 = vmatpush2.msra.mxu0 0.0
    %156 = vmatprep.subr.mxu0 0.0
    %157 = vmatpush2.msra.mxu0 0.0
    %158 = vmatprep.subr.mxu0 0.0
    %159 = vmatpush2.msra.mxu0 0.0
    %160 = vmatprep.mubr.f32.mxu0 0.0
    %161 = vmatmul.mubr.f32.gmra.mxu0 %v94
    %v162 = vpop.f32.mrf.mxu0
    %v163 = vadd.f32 %v90, %v162
    %v164 = vpop.f32.mrf.mxu0
    %165 = vdwg.mxu0
    %v166 = vmax.f32 %v163, 0.0
    %v167 = vld [vmem:[#allocation7] sm:$0xff]
    %v168 = vld [vmem:[#allocation7 + $0x8] sm:$0xff]
    %v169 = vld [vmem:[#allocation7 + $0x10] sm:$0xff]
    %v170 = vld [vmem:[#allocation7 + $0x18] sm:$0xff]
    %v171 = vld [vmem:[#allocation7 + $0x20] sm:$0xff]
    %v172 = vld [vmem:[#allocation7 + $0x28] sm:$0xff]
    %v173 = vld [vmem:[#allocation7 + $0x30] sm:$0xff]
    %v174 = vld [vmem:[#allocation7 + $0x38] sm:$0xff]
    %v175 = vld [vmem:[#allocation7 + $0x40] sm:$0xff]
    %v176 = vld [vmem:[#allocation7 + $0x48] sm:$0xff]
    %v177 = vld [vmem:[#allocation7 + $0x50] sm:$0xff]
    %v178 = vld [vmem:[#allocation7 + $0x58] sm:$0xff]
    %v179 = vld [vmem:[#allocation7 + $0x60] sm:$0xff]
    %v180 = vld [vmem:[#allocation7 + $0x68] sm:$0xff]
    %v181 = vld [vmem:[#allocation7 + $0x70] sm:$0xff]
    %v182 = vld [vmem:[#allocation7 + $0x78] sm:$0xff]
    %v183 = vld [vmem:[%s4] sm:$0x1]
    %v185 = vlaneseq
    %v186 = vshrl.u32 %v185, 7
    %v187 = vsub.s32 0, %v186
    %v188 = vrot.slane %v183, %v187
    %190 = vmatprep.subr.mxu0 0.0
    %191 = vmatpush1.msra.mxu0 %v182
    %192 = vmatprep.subr.mxu0 0.0
    %193 = vmatpush1.msra.mxu0 %v181
    %194 = vmatprep.subr.mxu0 0.0
    %195 = vmatpush1.msra.mxu0 %v180
    %196 = vmatprep.subr.mxu0 0.0
    %197 = vmatpush1.msra.mxu0 %v179
    %198 = vmatprep.subr.mxu0 0.0
    %199 = vmatpush1.msra.mxu0 %v178
    %200 = vmatprep.subr.mxu0 0.0
    %201 = vmatpush1.msra.mxu0 %v177
    %202 = vmatprep.subr.mxu0 0.0
    %203 = vmatpush1.msra.mxu0 %v176
    %204 = vmatprep.subr.mxu0 0.0
    %205 = vmatpush1.msra.mxu0 %v175
    %206 = vmatprep.subr.mxu0 0.0
    %207 = vmatpush1.msra.mxu0 %v174
    %208 = vmatprep.subr.mxu0 0.0
    %209 = vmatpush1.msra.mxu0 %v173
    %210 = vmatprep.subr.mxu0 0.0
    %211 = vmatpush1.msra.mxu0 %v172
    %212 = vmatprep.subr.mxu0 0.0
    %213 = vmatpush1.msra.mxu0 %v171
    %214 = vmatprep.subr.mxu0 0.0
    %215 = vmatpush1.msra.mxu0 %v170
    %216 = vmatprep.subr.mxu0 0.0
    %217 = vmatpush1.msra.mxu0 %v169
    %218 = vmatprep.subr.mxu0 0.0
    %219 = vmatpush1.msra.mxu0 %v168
    %220 = vmatprep.subr.mxu0 0.0
    %221 = vmatpush1.msra.mxu0 %v167
    %222 = vmatprep.subr.mxu0 0.0
    %223 = vmatpush2.msra.mxu0 0.0
    %224 = vmatprep.subr.mxu0 0.0
    %225 = vmatpush2.msra.mxu0 0.0
    %226 = vmatprep.subr.mxu0 0.0
    %227 = vmatpush2.msra.mxu0 0.0
    %228 = vmatprep.subr.mxu0 0.0
    %229 = vmatpush2.msra.mxu0 0.0
    %230 = vmatprep.subr.mxu0 0.0
    %231 = vmatpush2.msra.mxu0 0.0
    %232 = vmatprep.subr.mxu0 0.0
    %233 = vmatpush2.msra.mxu0 0.0
    %234 = vmatprep.subr.mxu0 0.0
    %235 = vmatpush2.msra.mxu0 0.0
    %236 = vmatprep.subr.mxu0 0.0
    %237 = vmatpush2.msra.mxu0 0.0
    %238 = vmatprep.subr.mxu0 0.0
    %239 = vmatpush2.msra.mxu0 0.0
    %240 = vmatprep.subr.mxu0 0.0
    %241 = vmatpush2.msra.mxu0 0.0
    %242 = vmatprep.subr.mxu0 0.0
    %243 = vmatpush2.msra.mxu0 0.0
    %244 = vmatprep.subr.mxu0 0.0
    %245 = vmatpush2.msra.mxu0 0.0
    %246 = vmatprep.subr.mxu0 0.0
    %247 = vmatpush2.msra.mxu0 0.0
    %248 = vmatprep.subr.mxu0 0.0
    %249 = vmatpush2.msra.mxu0 0.0
    %250 = vmatprep.subr.mxu0 0.0
    %251 = vmatpush2.msra.mxu0 0.0
    %252 = vmatprep.subr.mxu0 0.0
    %253 = vmatpush2.msra.mxu0 0.0
    %254 = vmatprep.mubr.f32.mxu0 0.0
    %255 = vmatmul.mubr.f32.gmra.mxu0 %v166
    %v256 = vpop.f32.mrf.mxu0
    %v257 = vadd.f32 %v188, %v256
    %v258 = vpop.f32.mrf.mxu0
    %259 = vdwg.mxu0
    %v260 = vmax.f32 %v257, 0.0
    %v261 = vld [vmem:[#allocation8] sm:$0xff]
    %v262 = vld [vmem:[#allocation8 + $0x8] sm:$0xff]
    %v263 = vld [vmem:[#allocation8 + $0x10] sm:$0xff]
    %v264 = vld [vmem:[#allocation8 + $0x18] sm:$0xff]
    %v265 = vld [vmem:[#allocation8 + $0x20] sm:$0xff]
    %v266 = vld [vmem:[#allocation8 + $0x28] sm:$0xff]
    %v267 = vld [vmem:[#allocation8 + $0x30] sm:$0xff]
    %v268 = vld [vmem:[#allocation8 + $0x38] sm:$0xff]
    %v269 = vld [vmem:[#allocation8 + $0x40] sm:$0xff]
    %v270 = vld [vmem:[#allocation8 + $0x48] sm:$0xff]
    %v271 = vld [vmem:[#allocation8 + $0x50] sm:$0xff]
    %v272 = vld [vmem:[#allocation8 + $0x58] sm:$0xff]
    %v273 = vld [vmem:[#allocation8 + $0x60] sm:$0xff]
    %v274 = vld [vmem:[#allocation8 + $0x68] sm:$0xff]
    %v275 = vld [vmem:[#allocation8 + $0x70] sm:$0xff]
    %v276 = vld [vmem:[#allocation8 + $0x78] sm:$0xff]
    %v277 = vld [vmem:[%s6] sm:$0x1]
    %v279 = vlaneseq
    %v280 = vshrl.u32 %v279, 7
    %v281 = vsub.s32 0, %v280
    %v282 = vrot.slane %v277, %v281
    %284 = vmatprep.subr.mxu0 0.0
    %285 = vmatpush1.msra.mxu0 %v276
    %286 = vmatprep.subr.mxu0 0.0
    %287 = vmatpush1.msra.mxu0 %v275
    %288 = vmatprep.subr.mxu0 0.0
    %289 = vmatpush1.msra.mxu0 %v274
    %290 = vmatprep.subr.mxu0 0.0
    %291 = vmatpush1.msra.mxu0 %v273
    %292 = vmatprep.subr.mxu0 0.0
    %293 = vmatpush1.msra.mxu0 %v272
    %294 = vmatprep.subr.mxu0 0.0
    %295 = vmatpush1.msra.mxu0 %v271
    %296 = vmatprep.subr.mxu0 0.0
    %297 = vmatpush1.msra.mxu0 %v270
    %298 = vmatprep.subr.mxu0 0.0
    %299 = vmatpush1.msra.mxu0 %v269
    %300 = vmatprep.subr.mxu0 0.0
    %301 = vmatpush1.msra.mxu0 %v268
    %302 = vmatprep.subr.mxu0 0.0
    %303 = vmatpush1.msra.mxu0 %v267
    %304 = vmatprep.subr.mxu0 0.0
    %305 = vmatpush1.msra.mxu0 %v266
    %306 = vmatprep.subr.mxu0 0.0
    %307 = vmatpush1.msra.mxu0 %v265
    %308 = vmatprep.subr.mxu0 0.0
    %309 = vmatpush1.msra.mxu0 %v264
    %310 = vmatprep.subr.mxu0 0.0
    %311 = vmatpush1.msra.mxu0 %v263
    %312 = vmatprep.subr.mxu0 0.0
    %313 = vmatpush1.msra.mxu0 %v262
    %314 = vmatprep.subr.mxu0 0.0
    %315 = vmatpush1.msra.mxu0 %v261
    %316 = vmatprep.subr.mxu0 0.0
    %317 = vmatpush2.msra.mxu0 0.0
    %318 = vmatprep.subr.mxu0 0.0
    %319 = vmatpush2.msra.mxu0 0.0
    %320 = vmatprep.subr.mxu0 0.0
    %321 = vmatpush2.msra.mxu0 0.0
    %322 = vmatprep.subr.mxu0 0.0
    %323 = vmatpush2.msra.mxu0 0.0
    %324 = vmatprep.subr.mxu0 0.0
    %325 = vmatpush2.msra.mxu0 0.0
    %326 = vmatprep.subr.mxu0 0.0
    %327 = vmatpush2.msra.mxu0 0.0
    %328 = vmatprep.subr.mxu0 0.0
    %329 = vmatpush2.msra.mxu0 0.0
    %330 = vmatprep.subr.mxu0 0.0
    %331 = vmatpush2.msra.mxu0 0.0
    %332 = vmatprep.subr.mxu0 0.0
    %333 = vmatpush2.msra.mxu0 0.0
    %334 = vmatprep.subr.mxu0 0.0
    %335 = vmatpush2.msra.mxu0 0.0
    %336 = vmatprep.subr.mxu0 0.0
    %337 = vmatpush2.msra.mxu0 0.0
    %338 = vmatprep.subr.mxu0 0.0
    %339 = vmatpush2.msra.mxu0 0.0
    %340 = vmatprep.subr.mxu0 0.0
    %341 = vmatpush2.msra.mxu0 0.0
    %342 = vmatprep.subr.mxu0 0.0
    %343 = vmatpush2.msra.mxu0 0.0
    %344 = vmatprep.subr.mxu0 0.0
    %345 = vmatpush2.msra.mxu0 0.0
    %346 = vmatprep.subr.mxu0 0.0
    %347 = vmatpush2.msra.mxu0 0.0
    %348 = vmatprep.mubr.f32.mxu0 0.0
    %349 = vmatmul.mubr.f32.gmra.mxu0 %v260
    %v350 = vpop.f32.mrf.mxu0
    %v351 = vadd.f32 %v282, %v350
    %v352 = vpop.f32.mrf.mxu0
    %353 = vdwg.mxu0
    %v354 = vmax.f32 %v351, 0.0
    %355 = vst [vmem:[#allocation10] sm:$0xff] %v354
    // Predicated region
    $region46: #{_elasticnet_forward.1} parent=1 // pred_check
      _
    $region47: #{_elasticnet_forward.1} parent=1 // pred_check_branch
      %357 = sbr.rel (0) target = $region49
    $region48: #{_elasticnet_forward.1} parent=1 // pred_region
      %s359 = ssub.s32 128, 128
      %360 = vsyncadd [#allocation4], %s359
      %s362 = sshll.u32 [#allocation10], 4
      %s363 = int_to_ptr.vmem [resolvable:$true] %s362
      %365 = dma.vmem_to_hbm [thread:$0]  %s363, 128, %s7, [#allocation4]
    $region49: #{_elasticnet_forward.1} parent=1 // pred_fallthru
      _
    // Predicated region
    $region50: #{_elasticnet_forward.1} parent=1 // pred_check
      _
    $region51: #{_elasticnet_forward.1} parent=1 // pred_check_branch
      %367 = sbr.rel (0) target = $region53
    $region52: #{_elasticnet_forward.1} parent=1 // pred_region
      %368 = dma.done [#allocation4], 128
    $region53: #{_elasticnet_forward.1} parent=1 // pred_fallthru
      _
    %369 = vsyncpa [#allocation3], 1
    %370 = vsyncpa [#allocation6], 1
    %371 = vsyncpa [#allocation9], 1
    %372 = vsyncpa [#allocation4], 1

</llo_original>
